<compile_context>
chip_gen: v6e
topology: v6e:2x2x1
jax: 0.10.0
libtpu: 0.0.40
codegen_flags: <defaults>
</compile_context>

<pallas_src>
import jax
import jax.numpy as jnp
from jax.experimental import pallas as pl
from jax.experimental.pallas import tpu as pltpu

# ----------------------------- problem sizes --------------------------------
BATCH  = 2
C_IN   = 4
C_OUT  = 8
H = W  = 16
KSIZE  = 3
PAD    = KSIZE // 2          # "same" padding, stride 1
BN_EPS = 1e-5


# ------------------------------- kernel --------------------------------------
def _conv_bn_relu_kernel(x_ref, w_ref, scale_ref, shift_ref, o_ref):
    """One batch image per grid step.

    x_ref     : (H + 2*PAD, (W + 2*PAD) * C_IN)  padded, channels-last, (w,c) flattened
    w_ref     : (KSIZE, KSIZE, W*C_IN, W*C_OUT)  width-block-diagonal conv weights
    scale_ref : (1, W*C_OUT)  folded BN scale (per channel, tiled over width)
    shift_ref : (1, W*C_OUT)  folded BN shift + conv bias
    o_ref     : (H, W*C_OUT)  lane-dense output slab (W*C_OUT == 128 lanes)
    """
    x = x_ref[...]                                        # single VMEM load
    acc = jnp.zeros((H, W * C_OUT), jnp.float32)
    for ky in range(KSIZE):                               # 9 static taps, unrolled
        for kx in range(KSIZE):
            patch = x[ky:ky + H, kx * C_IN:(kx + W) * C_IN]      # (H, W*C_IN)
            acc = acc + jnp.dot(patch, w_ref[ky, kx],
                                preferred_element_type=jnp.float32)
    # fused BN (scale/shift) + ReLU epilogue, single lane-dense store
    o_ref[...] = jnp.maximum(acc * scale_ref[...] + shift_ref[...], 0.0)


# ------------------------------- wrapper -------------------------------------
def fused_conv_bn_relu(x_nchw, params):
    """x_nchw: (B, C_IN, H, W) -> (B, C_OUT, H, W) = relu(bn(conv(x)))."""
    w_oihw = params["conv_w"]            # (C_OUT, C_IN, K, K)
    b_conv = params["conv_b"]            # (C_OUT,)
    gamma, beta = params["bn_gamma"], params["bn_beta"]
    mean, var = params["bn_mean"], params["bn_var"]

    B = x_nchw.shape[0]
    Hp, Wp = H + 2 * PAD, W + 2 * PAD

    # ---- layout plumbing (wrapper side, pure relayout) ----
    x_nhwc = jnp.transpose(x_nchw, (0, 2, 3, 1))                    # NHWC
    x_pad = jnp.pad(x_nhwc, ((0, 0), (PAD, PAD), (PAD, PAD), (0, 0)))
    x2 = x_pad.reshape(B, Hp, Wp * C_IN)

    # ---- conv weights -> width-block-diagonal form (per tap) ----
    w_hwio = jnp.transpose(w_oihw, (2, 3, 1, 0))                    # (K,K,Cin,Cout)
    wblk = jnp.einsum("ij,klcd->klicjd",
                      jnp.eye(W, dtype=jnp.float32), w_hwio)
    wblk = wblk.reshape(KSIZE, KSIZE, W * C_IN, W * C_OUT)

    # ---- fold BN (running stats) + conv bias into per-channel scale/shift ----
    inv = jax.lax.rsqrt(var + BN_EPS)
    scale = gamma * inv                                             # (C_OUT,)
    shift = beta + (b_conv - mean) * scale                          # (C_OUT,)
    scale_t = jnp.tile(scale, W).reshape(1, W * C_OUT)
    shift_t = jnp.tile(shift, W).reshape(1, W * C_OUT)

    out2 = pl.pallas_call(
        _conv_bn_relu_kernel,
        out_shape=jax.ShapeDtypeStruct((B, H, W * C_OUT), jnp.float32),
        grid=(B,),
        in_specs=[
            pl.BlockSpec((None, Hp, Wp * C_IN), lambda i: (i, 0, 0)),
            pl.BlockSpec((KSIZE, KSIZE, W * C_IN, W * C_OUT),
                         lambda i: (0, 0, 0, 0)),
            pl.BlockSpec((1, W * C_OUT), lambda i: (0, 0)),
            pl.BlockSpec((1, W * C_OUT), lambda i: (0, 0)),
        ],
        out_specs=pl.BlockSpec((None, H, W * C_OUT), lambda i: (i, 0, 0)),
        compiler_params=pltpu.CompilerParams(
            dimension_semantics=("parallel",)),   # v7x: one image per TensorCore
    )(x2, wblk, scale_t, shift_t)

    # lane-dense slab (B, H, W*C_OUT) -> NCHW
    return jnp.transpose(out2.reshape(B, H, W, C_OUT), (0, 3, 1, 2))


# ------------------------------ reference ------------------------------------
def _reference(x_nchw, params):
    y = jax.lax.conv_general_dilated(
        x_nchw, params["conv_w"], window_strides=(1, 1),
        padding=((PAD, PAD), (PAD, PAD)),
        dimension_numbers=("NCHW", "OIHW", "NCHW"),
        precision=jax.lax.Precision.HIGHEST)
    y = y + params["conv_b"].reshape(1, -1, 1, 1)
    inv = jax.lax.rsqrt(params["bn_var"] + BN_EPS)
    y = (y - params["bn_mean"].reshape(1, -1, 1, 1)) \
        * (params["bn_gamma"] * inv).reshape(1, -1, 1, 1) \
        + params["bn_beta"].reshape(1, -1, 1, 1)
    return jnp.maximum(y, 0.0)


def init_params(key):
    k = jax.random.split(key, 6)
    fan_in = float(C_IN * KSIZE * KSIZE)
    return {
        "conv_w": jax.random.normal(k[0], (C_OUT, C_IN, KSIZE, KSIZE),
                                    jnp.float32) / jnp.sqrt(fan_in),
        "conv_b": jax.random.normal(k[1], (C_OUT,), jnp.float32) * 0.05,
        "bn_gamma": 1.0 + 0.1 * jax.random.normal(k[2], (C_OUT,), jnp.float32),
        "bn_beta": 0.1 * jax.random.normal(k[3], (C_OUT,), jnp.float32),
        "bn_mean": 0.1 * jax.random.normal(k[4], (C_OUT,), jnp.float32),
        "bn_var": jnp.abs(jax.random.normal(k[5], (C_OUT,), jnp.float32)) + 0.5,
    }


# --------------------------------- main ---------------------------------------
if __name__ == "__main__":
    key = jax.random.PRNGKey(0)
    pkey, xkey = jax.random.split(key)
    params = init_params(pkey)
    x = jax.random.normal(xkey, (BATCH, C_IN, H, W), jnp.float32)

    fwd = jax.jit(fused_conv_bn_relu)
    out = jax.block_until_ready(fwd(x, params))

    assert out.shape == (BATCH, C_OUT, H, W), out.shape
    assert bool(jnp.all(jnp.isfinite(out)))

    ref = _reference(x, params)
    err = float(jnp.max(jnp.abs(out - ref)))
    assert err < 2e-2, f"max abs error vs reference: {err}"

    print("KERNEL_OK")
</pallas_src>

<mosaic_0001>
module attributes {stable_mosaic.version = 11 : i64} {
  func.func @_conv_bn_relu_kernel(%arg0: i32, %arg1: memref<1x18x72xf32, #tpu.memory_space<vmem>>, %arg2: memref<3x3x64x128xf32, #tpu.memory_space<vmem>>, %arg3: memref<1x128xf32, #tpu.memory_space<vmem>>, %arg4: memref<1x128xf32, #tpu.memory_space<vmem>>, %arg5: memref<1x16x128xf32, #tpu.memory_space<vmem>>) attributes {dimension_semantics = [#tpu.dimension_semantics<parallel>], iteration_bounds = array<i64: 2>, scalar_prefetch = 0 : i64, scratch_operands = 0 : i64, tpu.core_type = #tpu.core_type<tc>, window_params = [{transform_indices = @transform_0, window_bounds = array<i64: 1, 18, 72>}, {pipeline_mode = #tpu.pipeline_mode<synchronous>, transform_indices = @transform_1, window_bounds = array<i64: 3, 3, 64, 128>}, {pipeline_mode = #tpu.pipeline_mode<synchronous>, transform_indices = @transform_2, window_bounds = array<i64: 1, 128>}, {pipeline_mode = #tpu.pipeline_mode<synchronous>, transform_indices = @transform_3, window_bounds = array<i64: 1, 128>}, {transform_indices = @transform_4, window_bounds = array<i64: 1, 16, 128>}]} {
    %c0 = arith.constant 0 : index
    %c0_0 = arith.constant 0 : index
    %c0_1 = arith.constant 0 : index
    %0 = vector.load %arg1[%c0, %c0_0, %c0_1] : memref<1x18x72xf32, #tpu.memory_space<vmem>>, vector<1x18x72xf32>
    %1 = vector.shape_cast %0 : vector<1x18x72xf32> to vector<18x72xf32>
    %cst = arith.constant 0.000000e+00 : f32
    %2 = vector.broadcast %cst : f32 to vector<16x128xf32>
    %3 = vector.extract_strided_slice %1 {offsets = [0, 0], sizes = [16, 64], strides = [1, 1]} : vector<18x72xf32> to vector<16x64xf32>
    %c0_2 = arith.constant 0 : index
    %c0_3 = arith.constant 0 : index
    %c0_4 = arith.constant 0 : index
    %c0_5 = arith.constant 0 : index
    %4 = vector.load %arg2[%c0_2, %c0_3, %c0_4, %c0_5] : memref<3x3x64x128xf32, #tpu.memory_space<vmem>>, vector<1x1x64x128xf32>
    %5 = vector.shape_cast %4 : vector<1x1x64x128xf32> to vector<64x128xf32>
    %cst_6 = arith.constant dense<0.000000e+00> : vector<16x128xf32>
    %6 = tpu.matmul %3, %5, %cst_6 {dimension_numbers = #tpu.dot_dimension_numbers<[1], [0], [0], [1], [0, 0, 1, 1], [], []>} : vector<16x64xf32>, vector<64x128xf32>, vector<16x128xf32> -> vector<16x128xf32>
    %7 = arith.addf %2, %6 : vector<16x128xf32>
    %8 = vector.extract_strided_slice %1 {offsets = [0, 4], sizes = [16, 64], strides = [1, 1]} : vector<18x72xf32> to vector<16x64xf32>
    %c0_7 = arith.constant 0 : index
    %c1 = arith.constant 1 : index
    %c0_8 = arith.constant 0 : index
    %c0_9 = arith.constant 0 : index
    %9 = vector.load %arg2[%c0_7, %c1, %c0_8, %c0_9] : memref<3x3x64x128xf32, #tpu.memory_space<vmem>>, vector<1x1x64x128xf32>
    %10 = vector.shape_cast %9 : vector<1x1x64x128xf32> to vector<64x128xf32>
    %cst_10 = arith.constant dense<0.000000e+00> : vector<16x128xf32>
    %11 = tpu.matmul %8, %10, %cst_10 {dimension_numbers = #tpu.dot_dimension_numbers<[1], [0], [0], [1], [0, 0, 1, 1], [], []>} : vector<16x64xf32>, vector<64x128xf32>, vector<16x128xf32> -> vector<16x128xf32>
    %12 = arith.addf %7, %11 : vector<16x128xf32>
    %13 = vector.extract_strided_slice %1 {offsets = [0, 8], sizes = [16, 64], strides = [1, 1]} : vector<18x72xf32> to vector<16x64xf32>
    %c0_11 = arith.constant 0 : index
    %c2 = arith.constant 2 : index
    %c0_12 = arith.constant 0 : index
    %c0_13 = arith.constant 0 : index
    %14 = vector.load %arg2[%c0_11, %c2, %c0_12, %c0_13] : memref<3x3x64x128xf32, #tpu.memory_space<vmem>>, vector<1x1x64x128xf32>
    %15 = vector.shape_cast %14 : vector<1x1x64x128xf32> to vector<64x128xf32>
    %cst_14 = arith.constant dense<0.000000e+00> : vector<16x128xf32>
    %16 = tpu.matmul %13, %15, %cst_14 {dimension_numbers = #tpu.dot_dimension_numbers<[1], [0], [0], [1], [0, 0, 1, 1], [], []>} : vector<16x64xf32>, vector<64x128xf32>, vector<16x128xf32> -> vector<16x128xf32>
    %17 = arith.addf %12, %16 : vector<16x128xf32>
    %18 = vector.extract_strided_slice %1 {offsets = [1, 0], sizes = [16, 64], strides = [1, 1]} : vector<18x72xf32> to vector<16x64xf32>
    %c1_15 = arith.constant 1 : index
    %c0_16 = arith.constant 0 : index
    %c0_17 = arith.constant 0 : index
    %c0_18 = arith.constant 0 : index
    %19 = vector.load %arg2[%c1_15, %c0_16, %c0_17, %c0_18] : memref<3x3x64x128xf32, #tpu.memory_space<vmem>>, vector<1x1x64x128xf32>
    %20 = vector.shape_cast %19 : vector<1x1x64x128xf32> to vector<64x128xf32>
    %cst_19 = arith.constant dense<0.000000e+00> : vector<16x128xf32>
    %21 = tpu.matmul %18, %20, %cst_19 {dimension_numbers = #tpu.dot_dimension_numbers<[1], [0], [0], [1], [0, 0, 1, 1], [], []>} : vector<16x64xf32>, vector<64x128xf32>, vector<16x128xf32> -> vector<16x128xf32>
    %22 = arith.addf %17, %21 : vector<16x128xf32>
    %23 = vector.extract_strided_slice %1 {offsets = [1, 4], sizes = [16, 64], strides = [1, 1]} : vector<18x72xf32> to vector<16x64xf32>
    %c1_20 = arith.constant 1 : index
    %c1_21 = arith.constant 1 : index
    %c0_22 = arith.constant 0 : index
    %c0_23 = arith.constant 0 : index
    %24 = vector.load %arg2[%c1_20, %c1_21, %c0_22, %c0_23] : memref<3x3x64x128xf32, #tpu.memory_space<vmem>>, vector<1x1x64x128xf32>
    %25 = vector.shape_cast %24 : vector<1x1x64x128xf32> to vector<64x128xf32>
    %cst_24 = arith.constant dense<0.000000e+00> : vector<16x128xf32>
    %26 = tpu.matmul %23, %25, %cst_24 {dimension_numbers = #tpu.dot_dimension_numbers<[1], [0], [0], [1], [0, 0, 1, 1], [], []>} : vector<16x64xf32>, vector<64x128xf32>, vector<16x128xf32> -> vector<16x128xf32>
    %27 = arith.addf %22, %26 : vector<16x128xf32>
    %28 = vector.extract_strided_slice %1 {offsets = [1, 8], sizes = [16, 64], strides = [1, 1]} : vector<18x72xf32> to vector<16x64xf32>
    %c1_25 = arith.constant 1 : index
    %c2_26 = arith.constant 2 : index
    %c0_27 = arith.constant 0 : index
    %c0_28 = arith.constant 0 : index
    %29 = vector.load %arg2[%c1_25, %c2_26, %c0_27, %c0_28] : memref<3x3x64x128xf32, #tpu.memory_space<vmem>>, vector<1x1x64x128xf32>
    %30 = vector.shape_cast %29 : vector<1x1x64x128xf32> to vector<64x128xf32>
    %cst_29 = arith.constant dense<0.000000e+00> : vector<16x128xf32>
    %31 = tpu.matmul %28, %30, %cst_29 {dimension_numbers = #tpu.dot_dimension_numbers<[1], [0], [0], [1], [0, 0, 1, 1], [], []>} : vector<16x64xf32>, vector<64x128xf32>, vector<16x128xf32> -> vector<16x128xf32>
    %32 = arith.addf %27, %31 : vector<16x128xf32>
    %33 = vector.extract_strided_slice %1 {offsets = [2, 0], sizes = [16, 64], strides = [1, 1]} : vector<18x72xf32> to vector<16x64xf32>
    %c2_30 = arith.constant 2 : index
    %c0_31 = arith.constant 0 : index
    %c0_32 = arith.constant 0 : index
    %c0_33 = arith.constant 0 : index
    %34 = vector.load %arg2[%c2_30, %c0_31, %c0_32, %c0_33] : memref<3x3x64x128xf32, #tpu.memory_space<vmem>>, vector<1x1x64x128xf32>
    %35 = vector.shape_cast %34 : vector<1x1x64x128xf32> to vector<64x128xf32>
    %cst_34 = arith.constant dense<0.000000e+00> : vector<16x128xf32>
    %36 = tpu.matmul %33, %35, %cst_34 {dimension_numbers = #tpu.dot_dimension_numbers<[1], [0], [0], [1], [0, 0, 1, 1], [], []>} : vector<16x64xf32>, vector<64x128xf32>, vector<16x128xf32> -> vector<16x128xf32>
    %37 = arith.addf %32, %36 : vector<16x128xf32>
    %38 = vector.extract_strided_slice %1 {offsets = [2, 4], sizes = [16, 64], strides = [1, 1]} : vector<18x72xf32> to vector<16x64xf32>
    %c2_35 = arith.constant 2 : index
    %c1_36 = arith.constant 1 : index
    %c0_37 = arith.constant 0 : index
    %c0_38 = arith.constant 0 : index
    %39 = vector.load %arg2[%c2_35, %c1_36, %c0_37, %c0_38] : memref<3x3x64x128xf32, #tpu.memory_space<vmem>>, vector<1x1x64x128xf32>
    %40 = vector.shape_cast %39 : vector<1x1x64x128xf32> to vector<64x128xf32>
    %cst_39 = arith.constant dense<0.000000e+00> : vector<16x128xf32>
    %41 = tpu.matmul %38, %40, %cst_39 {dimension_numbers = #tpu.dot_dimension_numbers<[1], [0], [0], [1], [0, 0, 1, 1], [], []>} : vector<16x64xf32>, vector<64x128xf32>, vector<16x128xf32> -> vector<16x128xf32>
    %42 = arith.addf %37, %41 : vector<16x128xf32>
    %43 = vector.extract_strided_slice %1 {offsets = [2, 8], sizes = [16, 64], strides = [1, 1]} : vector<18x72xf32> to vector<16x64xf32>
    %c2_40 = arith.constant 2 : index
    %c2_41 = arith.constant 2 : index
    %c0_42 = arith.constant 0 : index
    %c0_43 = arith.constant 0 : index
    %44 = vector.load %arg2[%c2_40, %c2_41, %c0_42, %c0_43] : memref<3x3x64x128xf32, #tpu.memory_space<vmem>>, vector<1x1x64x128xf32>
    %45 = vector.shape_cast %44 : vector<1x1x64x128xf32> to vector<64x128xf32>
    %cst_44 = arith.constant dense<0.000000e+00> : vector<16x128xf32>
    %46 = tpu.matmul %43, %45, %cst_44 {dimension_numbers = #tpu.dot_dimension_numbers<[1], [0], [0], [1], [0, 0, 1, 1], [], []>} : vector<16x64xf32>, vector<64x128xf32>, vector<16x128xf32> -> vector<16x128xf32>
    %47 = arith.addf %42, %46 : vector<16x128xf32>
    %c0_45 = arith.constant 0 : index
    %c0_46 = arith.constant 0 : index
    %48 = vector.load %arg3[%c0_45, %c0_46] : memref<1x128xf32, #tpu.memory_space<vmem>>, vector<1x128xf32>
    %49 = vector.broadcast %48 : vector<1x128xf32> to vector<16x128xf32>
    %50 = arith.mulf %47, %49 : vector<16x128xf32>
    %c0_47 = arith.constant 0 : index
    %c0_48 = arith.constant 0 : index
    %51 = vector.load %arg4[%c0_47, %c0_48] : memref<1x128xf32, #tpu.memory_space<vmem>>, vector<1x128xf32>
    %52 = vector.broadcast %51 : vector<1x128xf32> to vector<16x128xf32>
    %53 = arith.addf %50, %52 : vector<16x128xf32>
    %cst_49 = arith.constant 0.000000e+00 : f32
    %54 = vector.broadcast %cst_49 : f32 to vector<16x128xf32>
    %55 = arith.maximumf %53, %54 : vector<16x128xf32>
    %c0_50 = arith.constant 0 : index
    %c0_51 = arith.constant 0 : index
    %c0_52 = arith.constant 0 : index
    %56 = vector.load %arg5[%c0_50, %c0_51, %c0_52] : memref<1x16x128xf32, #tpu.memory_space<vmem>>, vector<1x16x128xf32>
    %57 = vector.shape_cast %56 : vector<1x16x128xf32> to vector<16x128xf32>
    %58 = vector.shape_cast %55 : vector<16x128xf32> to vector<1x16x128xf32>
    tpu.vector_store %arg5[%c0_50, %c0_51, %c0_52], %58 {strides = array<i32>} : memref<1x16x128xf32, #tpu.memory_space<vmem>>, vector<1x16x128xf32>,
    return
  }
  func.func @transform_0(%arg0: i32) -> (i32, i32, i32) {
    %c0_i32 = arith.constant 0 : i32
    %c0_i32_0 = arith.constant 0 : i32
    %c0_i32_1 = arith.constant 0 : i32
    return %arg0, %c0_i32, %c0_i32_0 : i32, i32, i32
  }
  func.func @transform_1(%arg0: i32) -> (i32, i32, i32, i32) {
    %c0_i32 = arith.constant 0 : i32
    %c0_i32_0 = arith.constant 0 : i32
    %c0_i32_1 = arith.constant 0 : i32
    %c0_i32_2 = arith.constant 0 : i32
    %c0_i32_3 = arith.constant 0 : i32
    return %c0_i32, %c0_i32_0, %c0_i32_1, %c0_i32_2 : i32, i32, i32, i32
  }
  func.func @transform_2(%arg0: i32) -> (i32, i32) {
    %c0_i32 = arith.constant 0 : i32
    %c0_i32_0 = arith.constant 0 : i32
    %c0_i32_1 = arith.constant 0 : i32
    return %c0_i32, %c0_i32_0 : i32, i32
  }
  func.func @transform_3(%arg0: i32) -> (i32, i32) {
    %c0_i32 = arith.constant 0 : i32
    %c0_i32_0 = arith.constant 0 : i32
    %c0_i32_1 = arith.constant 0 : i32
    return %c0_i32, %c0_i32_0 : i32, i32
  }
  func.func @transform_4(%arg0: i32) -> (i32, i32, i32) {
    %c0_i32 = arith.constant 0 : i32
    %c0_i32_0 = arith.constant 0 : i32
    %c0_i32_1 = arith.constant 0 : i32
    return %arg0, %c0_i32, %c0_i32_0 : i32, i32, i32
  }
}

</mosaic_0001>

<llo_original>
// kernel: tile.13
$region0: #{tile.13}
  #allocation0 [shape = 's32[1]{0}', space=sflag, size = 0x4, scoped, tag = 'scoped memory for tile.13']
  %s0 = inlined_call_operand.vmem [shape: f32[8], index: 0, kind: input, shape index: {}]
  %s1 = inlined_call_operand.vmem [shape: f32[16,8], index: 1, kind: output, shape index: {}]
  // Predicated region
  $region2: #{tile.13} parent=0 // pred_check
    _
  $region3: #{tile.13} parent=0 // pred_check_branch
    %3 = sbr.rel (0) target = $region5
  $region4: #{tile.13} parent=0 // pred_region
    _
  $region5: #{tile.13} parent=0 // pred_fallthru
    _
  %v4 = vld [vmem:[%s0] ss:$0 sm:$0xff]
  %5 = vst [vmem:[%s1] sm:$0xff] %v4
  %s6 = scalar_lea.vmem %s1, 8
  %7 = vst [vmem:[%s6] sm:$0xff] %v4

// kernel: tile.14
$region0: #{tile.14}
  %s0 = inlined_call_operand.vmem [shape: f32[16,8], index: 0, kind: input, shape index: {}]
  %s1 = inlined_call_operand.vmem [shape: f32[1,128], index: 1, kind: output, shape index: {}]
  $region1: #{tile.14} parent=0
    #allocation0 [shape = 'u8[4096]{0}', space=vmem, size = 0x1000, scoped, tag = 'scoped mem for output reshape']
    %v2 = vld [vmem:[%s0] sm:$0x1]
    %vm3 = vcmask 64512
    %4 = vst.msk [vmem:[#allocation0] sm:$0x1] %vm3, %v2
    %s5 = scalar_lea.vmem %s0, 15
    %v6 = vld [vmem:[%s5] sm:$0x1]
    %7 = vrot.lane.b32.xlu0 %v6, 120
    %v8 = vpop.permute.xlu0 %7
    %vm9 = vcmask 1048512
    %10 = vst.msk [vmem:[#allocation0] sm:$0x1] %vm9, %v8
    %s11 = scalar_lea.vmem %s0, 14
    %v12 = vld [vmem:[%s11] sm:$0x1]
    %13 = vrot.lane.b32.xlu0 %v12, 112
    %v14 = vpop.permute.xlu0 %13
    %vm15 = vcmask 982912
    %16 = vst.msk [vmem:[#allocation0] sm:$0x1] %vm15, %v14
    %s17 = scalar_lea.vmem %s0, 13
    %v18 = vld [vmem:[%s17] sm:$0x1]
    %19 = vrot.lane.b32.xlu0 %v18, 104
    %v20 = vpop.permute.xlu0 %19
    %vm21 = vcmask 917312
    %22 = vst.msk [vmem:[#allocation0] sm:$0x1] %vm21, %v20
    %s23 = scalar_lea.vmem %s0, 12
    %v24 = vld [vmem:[%s23] sm:$0x1]
    %25 = vrot.lane.b32.xlu0 %v24, 96
    %v26 = vpop.permute.xlu0 %25
    %vm27 = vcmask 851712
    %28 = vst.msk [vmem:[#allocation0] sm:$0x1] %vm27, %v26
    %s29 = scalar_lea.vmem %s0, 11
    %v30 = vld [vmem:[%s29] sm:$0x1]
    %31 = vrot.lane.b32.xlu0 %v30, 88
    %v32 = vpop.permute.xlu0 %31
    %vm33 = vcmask 786112
    %34 = vst.msk [vmem:[#allocation0] sm:$0x1] %vm33, %v32
    %s35 = scalar_lea.vmem %s0, 10
    %v36 = vld [vmem:[%s35] sm:$0x1]
    %37 = vrot.lane.b32.xlu0 %v36, 80
    %v38 = vpop.permute.xlu0 %37
    %vm39 = vcmask 720512
    %40 = vst.msk [vmem:[#allocation0] sm:$0x1] %vm39, %v38
    %s41 = scalar_lea.vmem %s0, 9
    %v42 = vld [vmem:[%s41] sm:$0x1]
    %43 = vrot.lane.b32.xlu0 %v42, 72
    %v44 = vpop.permute.xlu0 %43
    %vm45 = vcmask 654912
    %46 = vst.msk [vmem:[#allocation0] sm:$0x1] %vm45, %v44
    %s47 = scalar_lea.vmem %s0, 8
    %v48 = vld [vmem:[%s47] sm:$0x1]
    %49 = vrot.lane.b32.xlu0 %v48, 64
    %v50 = vpop.permute.xlu0 %49
    %vm51 = vcmask 589312
    %52 = vst.msk [vmem:[#allocation0] sm:$0x1] %vm51, %v50
    %s53 = scalar_lea.vmem %s0, 7
    %v54 = vld [vmem:[%s53] sm:$0x1]
    %55 = vrot.lane.b32.xlu0 %v54, 56
    %v56 = vpop.permute.xlu0 %55
    %vm57 = vcmask 523712
    %58 = vst.msk [vmem:[#allocation0] sm:$0x1] %vm57, %v56
    %s59 = scalar_lea.vmem %s0, 6
    %v60 = vld [vmem:[%s59] sm:$0x1]
    %61 = vrot.lane.b32.xlu0 %v60, 48
    %v62 = vpop.permute.xlu0 %61
    %vm63 = vcmask 458112
    %64 = vst.msk [vmem:[#allocation0] sm:$0x1] %vm63, %v62
    %s65 = scalar_lea.vmem %s0, 5
    %v66 = vld [vmem:[%s65] sm:$0x1]
    %67 = vrot.lane.b32.xlu0 %v66, 40
    %v68 = vpop.permute.xlu0 %67
    %vm69 = vcmask 392512
    %70 = vst.msk [vmem:[#allocation0] sm:$0x1] %vm69, %v68
    %s71 = scalar_lea.vmem %s0, 4
    %v72 = vld [vmem:[%s71] sm:$0x1]
    %73 = vrot.lane.b32.xlu0 %v72, 32
    %v74 = vpop.permute.xlu0 %73
    %vm75 = vcmask 326912
    %76 = vst.msk [vmem:[#allocation0] sm:$0x1] %vm75, %v74
    %s77 = scalar_lea.vmem %s0, 3
    %v78 = vld [vmem:[%s77] sm:$0x1]
    %79 = vrot.lane.b32.xlu0 %v78, 24
    %v80 = vpop.permute.xlu0 %79
    %vm81 = vcmask 261312
    %82 = vst.msk [vmem:[#allocation0] sm:$0x1] %vm81, %v80
    %s83 = scalar_lea.vmem %s0, 2
    %v84 = vld [vmem:[%s83] sm:$0x1]
    %85 = vrot.lane.b32.xlu0 %v84, 16
    %v86 = vpop.permute.xlu0 %85
    %vm87 = vcmask 195712
    %88 = vst.msk [vmem:[#allocation0] sm:$0x1] %vm87, %v86
    %s89 = scalar_lea.vmem %s0, 1
    %v90 = vld [vmem:[%s89] sm:$0x1]
    %91 = vrot.lane.b32.xlu0 %v90, 8
    %v92 = vpop.permute.xlu0 %91
    %vm93 = vcmask 130112
    %94 = vst.msk [vmem:[#allocation0] sm:$0x1] %vm93, %v92
    %s96 = sshll.u32 1, 1
    %s97 = ssub.s32 %s96, 1
    %v99 = vld [vmem:[#allocation0] sm:%s97]
    %s100 = sshll.u32 1, 1
    %s101 = ssub.s32 %s100, 1
    %102 = vst [vmem:[%s1] sm:%s101] %v99

// kernel: fused_conv_bn_relu.1
$region0: #{fused_conv_bn_relu.1}
  #allocation0 [shape = 'u32[]', space=smem, size = 0x4, offset = 0x4, fixed_abs, tag = 'smem constant byte address 0x4 - core index']
  #allocation1 [shape = 'u32[144,128]{1,0:T(1,128)}', space=vmem, size = 0x12000, scoped, tag = 'internal scratch']
  %s0 = inlined_call_operand.vmem [shape: f32[2,18,72], index: 0, kind: input, shape index: {}]
  %s1 = inlined_call_operand.vmem [shape: f32[3,3,64,128], index: 1, kind: input, shape index: {}]
  %s2 = inlined_call_operand.vmem [shape: f32[1,128], index: 2, kind: input, shape index: {}]
  %s3 = inlined_call_operand.vmem [shape: f32[1,128], index: 3, kind: input, shape index: {}]
  %s4 = inlined_call_operand.vmem [shape: f32[2,16,128], index: 4, kind: output, shape index: {}]
  %s5 = sld [smem:[#allocation0]]
  $region49: #{fused_conv_bn_relu.1} parent=0
    _
  %s7 = ssub.s32 1, %s5
  %s8 = scalar_select 0, %s7, %s5
  loop: start=0, step=1, limit=4
  $region2: #{fused_conv_bn_relu.1} parent=0 // loop_pre_header
    _
  $region3: #{fused_conv_bn_relu.1} parent=0 // loop_header
    %s10 = sphi 0, %s14
    %p11 = scmp.ge.s32.totalorder %s10, 4
    %s20 = sphi 0, %s22
    %s23 = sphi 0, %s20
    %s24 = sphi 0, %s23
    %s40 = sphi 0, %s24
    %s44 = sphi 0, %s44
    %s46 = sphi 0, %s44
    %s47 = sphi 0, %s46
    %s61 = sphi 0, %s47
    %s65 = sphi 0, %s65
    %s67 = sphi 0, %s65
    %s68 = sphi 0, %s67
    %s82 = sphi 0, %s68
    %s86 = sphi 0, %s86
    %s88 = sphi 0, %s86
    %s89 = sphi 0, %s88
    %s103 = sphi 0, %s89
    %s109 = sphi 0, %s111
    %s112 = sphi 0, %s109
    %s113 = sphi 0, %s112
    %s129 = sphi 0, %s113
  $region4: #{fused_conv_bn_relu.1} parent=0 // loop_header_branch
    %13 = sbr.rel (%p11) target = $region8
  $region5: #{fused_conv_bn_relu.1} parent=0 // loop_body
    %s15 = ssub.s32 %s10, 1
    %s16 = ssub.s32 %s10, 2
    %s17 = sadd.s32 %s10, 1
    %s18 = ssub.s32 %s10, %s17
    %p19 = scmp.eq.s32.totalorder %s18, 0
    %s21 = sadd.s32 %s20, 1
    %s22 = scalar_select %p19, %s20, %s21
    %p25 = pneg %p19
    %p26 = scmp.eq.s32.totalorder %s10, 1
    %p27 = por %p25, %p26
    %p28 = scmp.ne.s32.totalorder %s20, %s23
    %p29 = scmp.eq.s32.totalorder %s10, 0
    %p30 = por %p28, %p29
    %p31 = scmp.ne.s32.totalorder %s20, %s23
    %p32 = scmp.eq.s32.totalorder %s15, 1
    %p33 = por %p31, %p32
    %p34 = scmp.ne.s32.totalorder %s23, %s24
    %p35 = scmp.eq.s32.totalorder %s15, 0
    %p36 = por %p34, %p35
    %p37 = scmp.ne.s32.totalorder %s23, %s24
    %p38 = scmp.eq.s32.totalorder %s16, 1
    %p39 = por %p37, %p38
    %p41 = scmp.ne.s32.totalorder %s24, %s40
    %p42 = scmp.eq.s32.totalorder %s16, 0
    %p43 = por %p41, %p42
    %s45 = sadd.s32 %s44, 1
    %p48 = scmp.eq.s32.totalorder %s10, 1
    %p49 = scmp.ne.s32.totalorder %s44, %s46
    %p50 = scmp.eq.s32.totalorder %s10, 0
    %p51 = por %p49, %p50
    %p52 = scmp.ne.s32.totalorder %s44, %s46
    %p53 = scmp.eq.s32.totalorder %s15, 1
    %p54 = por %p52, %p53
    %p55 = scmp.ne.s32.totalorder %s46, %s47
    %p56 = scmp.eq.s32.totalorder %s15, 0
    %p57 = por %p55, %p56
    %p58 = scmp.ne.s32.totalorder %s46, %s47
    %p59 = scmp.eq.s32.totalorder %s16, 1
    %p60 = por %p58, %p59
    %p62 = scmp.ne.s32.totalorder %s47, %s61
    %p63 = scmp.eq.s32.totalorder %s16, 0
    %p64 = por %p62, %p63
    %s66 = sadd.s32 %s65, 1
    %p69 = scmp.eq.s32.totalorder %s10, 1
    %p70 = scmp.ne.s32.totalorder %s65, %s67
    %p71 = scmp.eq.s32.totalorder %s10, 0
    %p72 = por %p70, %p71
    %p73 = scmp.ne.s32.totalorder %s65, %s67
    %p74 = scmp.eq.s32.totalorder %s15, 1
    %p75 = por %p73, %p74
    %p76 = scmp.ne.s32.totalorder %s67, %s68
    %p77 = scmp.eq.s32.totalorder %s15, 0
    %p78 = por %p76, %p77
    %p79 = scmp.ne.s32.totalorder %s67, %s68
    %p80 = scmp.eq.s32.totalorder %s16, 1
    %p81 = por %p79, %p80
    %p83 = scmp.ne.s32.totalorder %s68, %s82
    %p84 = scmp.eq.s32.totalorder %s16, 0
    %p85 = por %p83, %p84
    %s87 = sadd.s32 %s86, 1
    %p90 = scmp.eq.s32.totalorder %s10, 1
    %p91 = scmp.ne.s32.totalorder %s86, %s88
    %p92 = scmp.eq.s32.totalorder %s10, 0
    %p93 = por %p91, %p92
    %p94 = scmp.ne.s32.totalorder %s86, %s88
    %p95 = scmp.eq.s32.totalorder %s15, 1
    %p96 = por %p94, %p95
    %p97 = scmp.ne.s32.totalorder %s88, %s89
    %p98 = scmp.eq.s32.totalorder %s15, 0
    %p99 = por %p97, %p98
    %p100 = scmp.ne.s32.totalorder %s88, %s89
    %p101 = scmp.eq.s32.totalorder %s16, 1
    %p102 = por %p100, %p101
    %p104 = scmp.ne.s32.totalorder %s89, %s103
    %p105 = scmp.eq.s32.totalorder %s16, 0
    %p106 = por %p104, %p105
    %s107 = ssub.s32 %s10, %s17
    %p108 = scmp.eq.s32.totalorder %s107, 0
    %s110 = sadd.s32 %s109, 1
    %s111 = scalar_select %p108, %s109, %s110
    %p114 = pneg %p108
    %p115 = scmp.eq.s32.totalorder %s10, 1
    %p116 = por %p114, %p115
    %p117 = scmp.ne.s32.totalorder %s109, %s112
    %p118 = scmp.eq.s32.totalorder %s10, 0
    %p119 = por %p117, %p118
    %p120 = scmp.ne.s32.totalorder %s109, %s112
    %p121 = scmp.eq.s32.totalorder %s15, 1
    %p122 = por %p120, %p121
    %p123 = scmp.ne.s32.totalorder %s112, %s113
    %p124 = scmp.eq.s32.totalorder %s15, 0
    %p125 = por %p123, %p124
    %p126 = scmp.ne.s32.totalorder %s112, %s113
    %p127 = scmp.eq.s32.totalorder %s16, 1
    %p128 = por %p126, %p127
    %p130 = scmp.ne.s32.totalorder %s113, %s129
    %p131 = scmp.eq.s32.totalorder %s16, 0
    %p132 = por %p130, %p131
    %p133 = scmp.le.s32.totalorder 1, %s10
    %p134 = scmp.lt.s32.totalorder %s10, 3
    %p135 = pnand %p133, %p134
    %p136 = pneg %p135
    // Predicated region
    $region9: #{fused_conv_bn_relu.1} parent=5 // pred_check
      _
    $region10: #{fused_conv_bn_relu.1} parent=5 // pred_check_branch
      %138 = sbr.rel (%p135) target = $region12
    $region11: #{fused_conv_bn_relu.1} parent=5 // pred_region
      %s139 = ssub.s32 %s10, 1
      // Predicated region
      $region13: #{fused_conv_bn_relu.1} parent=11 // pred_check
        %p140 = pneg %p57
      $region14: #{fused_conv_bn_relu.1} parent=11 // pred_check_branch
        %142 = sbr.rel (%p140) target = $region16
      $region15: #{fused_conv_bn_relu.1} parent=11 // pred_region
        _
      $region16: #{fused_conv_bn_relu.1} parent=11 // pred_fallthru
        _
      // Predicated region
      $region17: #{fused_conv_bn_relu.1} parent=11 // pred_check
        %p143 = pneg %p78
      $region18: #{fused_conv_bn_relu.1} parent=11 // pred_check_branch
        %145 = sbr.rel (%p143) target = $region20
      $region19: #{fused_conv_bn_relu.1} parent=11 // pred_region
        _
      $region20: #{fused_conv_bn_relu.1} parent=11 // pred_fallthru
        _
      // Predicated region
      $region21: #{fused_conv_bn_relu.1} parent=11 // pred_check
        %p146 = pneg %p99
      $region22: #{fused_conv_bn_relu.1} parent=11 // pred_check_branch
        %148 = sbr.rel (%p146) target = $region24
      $region23: #{fused_conv_bn_relu.1} parent=11 // pred_region
        _
      $region24: #{fused_conv_bn_relu.1} parent=11 // pred_fallthru
        _
    $region12: #{fused_conv_bn_relu.1} parent=5 // pred_fallthru
      _
    %p149 = scmp.lt.s32.totalorder %s10, 2
    // Predicated region
    $region25: #{fused_conv_bn_relu.1} parent=5 // pred_check
      %p150 = pneg %p149
    $region26: #{fused_conv_bn_relu.1} parent=5 // pred_check_branch
      %152 = sbr.rel (%p150) target = $region28
    $region27: #{fused_conv_bn_relu.1} parent=5 // pred_region
      // Predicated region
      $region29: #{fused_conv_bn_relu.1} parent=27 // pred_check
        %p153 = pneg %p30
      $region30: #{fused_conv_bn_relu.1} parent=27 // pred_check_branch
        %155 = sbr.rel (%p153) target = $region32
      $region31: #{fused_conv_bn_relu.1} parent=27 // pred_region
        %p156 = scmp.lt.s32.totalorder %s10, 1
        %s157 = scalar_select %p156, %s10, 1
        %s158 = smul.addr %s157, 3
        %s159 = smul.addr %s158, 8
        %s160 = scalar_lea.vmem %s0, %s159
      $region32: #{fused_conv_bn_relu.1} parent=27 // pred_fallthru
        _
    $region28: #{fused_conv_bn_relu.1} parent=5 // pred_fallthru
      _
    %p161 = scmp.le.s32.totalorder 1, %s10
    %p162 = scmp.lt.s32.totalorder %s10, 3
    %p163 = pnand %p161, %p162
    %p164 = pneg %p163
    // Predicated region
    $region33: #{fused_conv_bn_relu.1} parent=5 // pred_check
      _
    $region34: #{fused_conv_bn_relu.1} parent=5 // pred_check_branch
      %166 = sbr.rel (%p163) target = $region36
    $region35: #{fused_conv_bn_relu.1} parent=5 // pred_region
      %s167 = ssub.s32 %s10, 1
      %p168 = scmp.lt.s32.totalorder %s15, 1
      %s169 = scalar_select %p168, %s15, 1
      %s170 = smul.addr %s169, 3
      %s171 = smul.addr %s170, 8
      %s172 = scalar_lea.vmem %s0, %s171
      %p173 = pneg %p36
      %p174 = pneg %p33
      %p175 = pneg %p57
      %p176 = pneg %p54
      %p177 = pneg %p78
      %p178 = pneg %p75
      %p179 = pneg %p99
      %p180 = pneg %p96
      %p181 = pneg %p125
      %p182 = pneg %p122
      %p183 = scmp.lt.s32.totalorder %s15, 1
      %s184 = scalar_select %p183, %s15, 1
      %s185 = smul.addr %s184, 2
      %s186 = smul.addr %s185, 8
      %s187 = scalar_lea.vmem %s4, %s186
      %p188 = scmp.lt.s32.totalorder %s15, 1
      %s189 = scalar_select %p188, %s15, 1
      %s190 = smul.addr %s189, 3
      %s191 = smul.addr %s190, 8
      %s192 = scalar_lea.vmem %s0, %s191
      %p193 = scmp.lt.s32.totalorder %s15, 1
      %s194 = scalar_select %p193, %s15, 1
      %s195 = smul.addr %s194, 2
      %s196 = smul.addr %s195, 8
      %s197 = scalar_lea.vmem %s4, %s196
      %v198 = vld [vmem:[%s192] sm:$0xff]
      %v199 = vld [vmem:[%s192 + $0x8] sm:$0xff]
      %v200 = vld [vmem:[%s192 + $0x10] sm:$0x3]
      %v201 = vld [vmem:[%s1] sm:$0xff]
      %v202 = vld [vmem:[%s1 + $0x8] sm:$0xff]
      %v203 = vld [vmem:[%s1 + $0x10] sm:$0xff]
      %v204 = vld [vmem:[%s1 + $0x18] sm:$0xff]
      %v205 = vld [vmem:[%s1 + $0x20] sm:$0xff]
      %v206 = vld [vmem:[%s1 + $0x28] sm:$0xff]
      %v207 = vld [vmem:[%s1 + $0x30] sm:$0xff]
      %v208 = vld [vmem:[%s1 + $0x38] sm:$0xff]
      %s209 = scalar_lea.vmem %s1, 64
      %v210 = vld [vmem:[%s209] sm:$0xff]
      %v211 = vld [vmem:[%s209 + $0x8] sm:$0xff]
      %v212 = vld [vmem:[%s209 + $0x10] sm:$0xff]
      %v213 = vld [vmem:[%s209 + $0x18] sm:$0xff]
      %v214 = vld [vmem:[%s209 + $0x20] sm:$0xff]
      %v215 = vld [vmem:[%s209 + $0x28] sm:$0xff]
      %v216 = vld [vmem:[%s209 + $0x30] sm:$0xff]
      %v217 = vld [vmem:[%s209 + $0x38] sm:$0xff]
      %220 = vrot.lane.b32.xlu0 %v198, 124
      %v221 = vpop.permute.xlu0 %220
      %222 = vrot.lane.b32.xlu0 %v199, 124
      %v223 = vpop.permute.xlu0 %222
      %vm224 = vcmask 523264
      %v225 = vsel %vm224, %v221, 0
      %v227 = vsel %vm224, %v223, 0
      %229 = vmatprep.subr.mxu0 0.0
      %230 = vmatpush1.msra.mxu0 0.0
      %231 = vmatprep.subr.mxu0 0.0
      %232 = vmatpush1.msra.mxu0 0.0
      %233 = vmatprep.subr.mxu0 0.0
      %234 = vmatpush1.msra.mxu0 0.0
      %235 = vmatprep.subr.mxu0 0.0
      %236 = vmatpush1.msra.mxu0 0.0
      %237 = vmatprep.subr.mxu0 0.0
      %238 = vmatpush1.msra.mxu0 0.0
      %239 = vmatprep.subr.mxu0 0.0
      %240 = vmatpush1.msra.mxu0 0.0
      %241 = vmatprep.subr.mxu0 0.0
      %242 = vmatpush1.msra.mxu0 0.0
      %243 = vmatprep.subr.mxu0 0.0
      %244 = vmatpush1.msra.mxu0 0.0
      %245 = vmatprep.subr.mxu0 0.0
      %246 = vmatpush1.msra.mxu0 %v217
      %247 = vmatprep.subr.mxu0 0.0
      %248 = vmatpush1.msra.mxu0 %v216
      %249 = vmatprep.subr.mxu0 0.0
      %250 = vmatpush1.msra.mxu0 %v215
      %251 = vmatprep.subr.mxu0 0.0
      %252 = vmatpush1.msra.mxu0 %v214
      %253 = vmatprep.subr.mxu0 0.0
      %254 = vmatpush1.msra.mxu0 %v213
      %255 = vmatprep.subr.mxu0 0.0
      %256 = vmatpush1.msra.mxu0 %v212
      %257 = vmatprep.subr.mxu0 0.0
      %258 = vmatpush1.msra.mxu0 %v211
      %259 = vmatprep.subr.mxu0 0.0
      %260 = vmatpush1.msra.mxu0 %v210
      %261 = vmatprep.subr.mxu0 0.0
      %262 = vmatpush2.msra.mxu0 0.0
      %263 = vmatprep.subr.mxu0 0.0
      %264 = vmatpush2.msra.mxu0 0.0
      %265 = vmatprep.subr.mxu0 0.0
      %266 = vmatpush2.msra.mxu0 0.0
      %267 = vmatprep.subr.mxu0 0.0
      %268 = vmatpush2.msra.mxu0 0.0
      %269 = vmatprep.subr.mxu0 0.0
      %270 = vmatpush2.msra.mxu0 0.0
      %271 = vmatprep.subr.mxu0 0.0
      %272 = vmatpush2.msra.mxu0 0.0
      %273 = vmatprep.subr.mxu0 0.0
      %274 = vmatpush2.msra.mxu0 0.0
      %275 = vmatprep.subr.mxu0 0.0
      %276 = vmatpush2.msra.mxu0 0.0
      %277 = vmatprep.subr.mxu0 0.0
      %278 = vmatpush2.msra.mxu0 0.0
      %279 = vmatprep.subr.mxu0 0.0
      %280 = vmatpush2.msra.mxu0 0.0
      %281 = vmatprep.subr.mxu0 0.0
      %282 = vmatpush2.msra.mxu0 0.0
      %283 = vmatprep.subr.mxu0 0.0
      %284 = vmatpush2.msra.mxu0 0.0
      %285 = vmatprep.subr.mxu0 0.0
      %286 = vmatpush2.msra.mxu0 0.0
      %287 = vmatprep.subr.mxu0 0.0
      %288 = vmatpush2.msra.mxu0 0.0
      %289 = vmatprep.subr.mxu0 0.0
      %290 = vmatpush2.msra.mxu0 0.0
      %291 = vmatprep.subr.mxu0 0.0
      %292 = vmatpush2.msra.mxu0 0.0
      %293 = vmatprep.mubr.f32.mxu0 0.0
      %294 = vmatmul.mubr.f32.gmra.mxu0 %v225
      %v295 = vpop.f32.mrf.mxu0
      %v296 = vadd.f32 0.0, %v295
      %v297 = vpop.f32.mrf.mxu0
      %298 = vmatprep.mubr.f32.mxu0 0.0
      %299 = vmatmul.mubr.f32.gmra.mxu0 %v227
      %v300 = vpop.f32.mrf.mxu0
      %v301 = vadd.f32 0.0, %v300
      %v302 = vpop.f32.mrf.mxu0
      %303 = vdwg.mxu0
      %v304 = vsel %vm224, %v198, 0
      %v306 = vsel %vm224, %v199, 0
      %308 = vmatprep.subr.mxu0 0.0
      %309 = vmatpush1.msra.mxu0 0.0
      %310 = vmatprep.subr.mxu0 0.0
      %311 = vmatpush1.msra.mxu0 0.0
      %312 = vmatprep.subr.mxu0 0.0
      %313 = vmatpush1.msra.mxu0 0.0
      %314 = vmatprep.subr.mxu0 0.0
      %315 = vmatpush1.msra.mxu0 0.0
      %316 = vmatprep.subr.mxu0 0.0
      %317 = vmatpush1.msra.mxu0 0.0
      %318 = vmatprep.subr.mxu0 0.0
      %319 = vmatpush1.msra.mxu0 0.0
      %320 = vmatprep.subr.mxu0 0.0
      %321 = vmatpush1.msra.mxu0 0.0
      %322 = vmatprep.subr.mxu0 0.0
      %323 = vmatpush1.msra.mxu0 0.0
      %324 = vmatprep.subr.mxu0 0.0
      %325 = vmatpush1.msra.mxu0 %v208
      %326 = vmatprep.subr.mxu0 0.0
      %327 = vmatpush1.msra.mxu0 %v207
      %328 = vmatprep.subr.mxu0 0.0
      %329 = vmatpush1.msra.mxu0 %v206
      %330 = vmatprep.subr.mxu0 0.0
      %331 = vmatpush1.msra.mxu0 %v205
      %332 = vmatprep.subr.mxu0 0.0
      %333 = vmatpush1.msra.mxu0 %v204
      %334 = vmatprep.subr.mxu0 0.0
      %335 = vmatpush1.msra.mxu0 %v203
      %336 = vmatprep.subr.mxu0 0.0
      %337 = vmatpush1.msra.mxu0 %v202
      %338 = vmatprep.subr.mxu0 0.0
      %339 = vmatpush1.msra.mxu0 %v201
      %340 = vmatprep.subr.mxu0 0.0
      %341 = vmatpush2.msra.mxu0 0.0
      %342 = vmatprep.subr.mxu0 0.0
      %343 = vmatpush2.msra.mxu0 0.0
      %344 = vmatprep.subr.mxu0 0.0
      %345 = vmatpush2.msra.mxu0 0.0
      %346 = vmatprep.subr.mxu0 0.0
      %347 = vmatpush2.msra.mxu0 0.0
      %348 = vmatprep.subr.mxu0 0.0
      %349 = vmatpush2.msra.mxu0 0.0
      %350 = vmatprep.subr.mxu0 0.0
      %351 = vmatpush2.msra.mxu0 0.0
      %352 = vmatprep.subr.mxu0 0.0
      %353 = vmatpush2.msra.mxu0 0.0
      %354 = vmatprep.subr.mxu0 0.0
      %355 = vmatpush2.msra.mxu0 0.0
      %356 = vmatprep.subr.mxu0 0.0
      %357 = vmatpush2.msra.mxu0 0.0
      %358 = vmatprep.subr.mxu0 0.0
      %359 = vmatpush2.msra.mxu0 0.0
      %360 = vmatprep.subr.mxu0 0.0
      %361 = vmatpush2.msra.mxu0 0.0
      %362 = vmatprep.subr.mxu0 0.0
      %363 = vmatpush2.msra.mxu0 0.0
      %364 = vmatprep.subr.mxu0 0.0
      %365 = vmatpush2.msra.mxu0 0.0
      %366 = vmatprep.subr.mxu0 0.0
      %367 = vmatpush2.msra.mxu0 0.0
      %368 = vmatprep.subr.mxu0 0.0
      %369 = vmatpush2.msra.mxu0 0.0
      %370 = vmatprep.subr.mxu0 0.0
      %371 = vmatpush2.msra.mxu0 0.0
      %372 = vmatprep.mubr.f32.mxu0 0.0
      %373 = vmatmul.mubr.f32.gmra.mxu0 %v304
      %v374 = vpop.f32.mrf.mxu0
      %v375 = vadd.f32 %v296, %v374
      %v376 = vpop.f32.mrf.mxu0
      %377 = vmatprep.mubr.f32.mxu0 0.0
      %378 = vmatmul.mubr.f32.gmra.mxu0 %v306
      %v379 = vpop.f32.mrf.mxu0
      %v380 = vadd.f32 %v301, %v379
      %v381 = vpop.f32.mrf.mxu0
      %382 = vdwg.mxu0
      %s383 = scalar_lea.vmem %s1, 128
      %v384 = vld [vmem:[%s383] sm:$0xff]
      %v385 = vld [vmem:[%s383 + $0x8] sm:$0xff]
      %v386 = vld [vmem:[%s383 + $0x10] sm:$0xff]
      %v387 = vld [vmem:[%s383 + $0x18] sm:$0xff]
      %v388 = vld [vmem:[%s383 + $0x20] sm:$0xff]
      %v389 = vld [vmem:[%s383 + $0x28] sm:$0xff]
      %v390 = vld [vmem:[%s383 + $0x30] sm:$0xff]
      %v391 = vld [vmem:[%s383 + $0x38] sm:$0xff]
      %392 = vrot.lane.b32.xlu0 %v198, 120
      %v393 = vpop.permute.xlu0 %392
      %394 = vrot.lane.b32.xlu0 %v199, 120
      %v395 = vpop.permute.xlu0 %394
      %v396 = vsel %vm224, %v393, 0
      %v398 = vsel %vm224, %v395, 0
      %400 = vmatprep.subr.mxu0 0.0
      %401 = vmatpush1.msra.mxu0 0.0
      %402 = vmatprep.subr.mxu0 0.0
      %403 = vmatpush1.msra.mxu0 0.0
      %404 = vmatprep.subr.mxu0 0.0
      %405 = vmatpush1.msra.mxu0 0.0
      %406 = vmatprep.subr.mxu0 0.0
      %407 = vmatpush1.msra.mxu0 0.0
      %408 = vmatprep.subr.mxu0 0.0
      %409 = vmatpush1.msra.mxu0 0.0
      %410 = vmatprep.subr.mxu0 0.0
      %411 = vmatpush1.msra.mxu0 0.0
      %412 = vmatprep.subr.mxu0 0.0
      %413 = vmatpush1.msra.mxu0 0.0
      %414 = vmatprep.subr.mxu0 0.0
      %415 = vmatpush1.msra.mxu0 0.0
      %416 = vmatprep.subr.mxu0 0.0
      %417 = vmatpush1.msra.mxu0 %v391
      %418 = vmatprep.subr.mxu0 0.0
      %419 = vmatpush1.msra.mxu0 %v390
      %420 = vmatprep.subr.mxu0 0.0
      %421 = vmatpush1.msra.mxu0 %v389
      %422 = vmatprep.subr.mxu0 0.0
      %423 = vmatpush1.msra.mxu0 %v388
      %424 = vmatprep.subr.mxu0 0.0
      %425 = vmatpush1.msra.mxu0 %v387
      %426 = vmatprep.subr.mxu0 0.0
      %427 = vmatpush1.msra.mxu0 %v386
      %428 = vmatprep.subr.mxu0 0.0
      %429 = vmatpush1.msra.mxu0 %v385
      %430 = vmatprep.subr.mxu0 0.0
      %431 = vmatpush1.msra.mxu0 %v384
      %432 = vmatprep.subr.mxu0 0.0
      %433 = vmatpush2.msra.mxu0 0.0
      %434 = vmatprep.subr.mxu0 0.0
      %435 = vmatpush2.msra.mxu0 0.0
      %436 = vmatprep.subr.mxu0 0.0
      %437 = vmatpush2.msra.mxu0 0.0
      %438 = vmatprep.subr.mxu0 0.0
      %439 = vmatpush2.msra.mxu0 0.0
      %440 = vmatprep.subr.mxu0 0.0
      %441 = vmatpush2.msra.mxu0 0.0
      %442 = vmatprep.subr.mxu0 0.0
      %443 = vmatpush2.msra.mxu0 0.0
      %444 = vmatprep.subr.mxu0 0.0
      %445 = vmatpush2.msra.mxu0 0.0
      %446 = vmatprep.subr.mxu0 0.0
      %447 = vmatpush2.msra.mxu0 0.0
      %448 = vmatprep.subr.mxu0 0.0
      %449 = vmatpush2.msra.mxu0 0.0
      %450 = vmatprep.subr.mxu0 0.0
      %451 = vmatpush2.msra.mxu0 0.0
      %452 = vmatprep.subr.mxu0 0.0
      %453 = vmatpush2.msra.mxu0 0.0
      %454 = vmatprep.subr.mxu0 0.0
      %455 = vmatpush2.msra.mxu0 0.0
      %456 = vmatprep.subr.mxu0 0.0
      %457 = vmatpush2.msra.mxu0 0.0
      %458 = vmatprep.subr.mxu0 0.0
      %459 = vmatpush2.msra.mxu0 0.0
      %460 = vmatprep.subr.mxu0 0.0
      %461 = vmatpush2.msra.mxu0 0.0
      %462 = vmatprep.subr.mxu0 0.0
      %463 = vmatpush2.msra.mxu0 0.0
      %464 = vmatprep.mubr.f32.mxu0 0.0
      %465 = vmatmul.mubr.f32.gmra.mxu0 %v396
      %v466 = vpop.f32.mrf.mxu0
      %v467 = vadd.f32 0.0, %v466
      %v468 = vpop.f32.mrf.mxu0
      %469 = vmatprep.mubr.f32.mxu0 0.0
      %470 = vmatmul.mubr.f32.gmra.mxu0 %v398
      %v471 = vpop.f32.mrf.mxu0
      %v472 = vadd.f32 0.0, %v471
      %v473 = vpop.f32.mrf.mxu0
      %474 = vdwg.mxu0
      %v475 = vadd.f32 %v375, %v467
      %v476 = vadd.f32 %v380, %v472
      %s477 = scalar_lea.vmem %s1, 192
      %v478 = vld [vmem:[%s477] sm:$0xff]
      %v479 = vld [vmem:[%s477 + $0x8] sm:$0xff]
      %v480 = vld [vmem:[%s477 + $0x10] sm:$0xff]
      %v481 = vld [vmem:[%s477 + $0x18] sm:$0xff]
      %v482 = vld [vmem:[%s477 + $0x20] sm:$0xff]
      %v483 = vld [vmem:[%s477 + $0x28] sm:$0xff]
      %v484 = vld [vmem:[%s477 + $0x30] sm:$0xff]
      %v485 = vld [vmem:[%s477 + $0x38] sm:$0xff]
      %vm487 = vcmask 1046528
      %v488 = vrot.slane %v198, 1
      %v489 = vrot.slane %v199, 1
      %v490 = vsel %vm487, %v488, %v489
      %v491 = vrot.slane %v200, 1
      %v492 = vsel %vm487, %v489, %v491
      %v493 = vsel %vm224, %v490, 0
      %v495 = vsel %vm224, %v492, 0
      %497 = vmatprep.subr.mxu0 0.0
      %498 = vmatpush1.msra.mxu0 0.0
      %499 = vmatprep.subr.mxu0 0.0
      %500 = vmatpush1.msra.mxu0 0.0
      %501 = vmatprep.subr.mxu0 0.0
      %502 = vmatpush1.msra.mxu0 0.0
      %503 = vmatprep.subr.mxu0 0.0
      %504 = vmatpush1.msra.mxu0 0.0
      %505 = vmatprep.subr.mxu0 0.0
      %506 = vmatpush1.msra.mxu0 0.0
      %507 = vmatprep.subr.mxu0 0.0
      %508 = vmatpush1.msra.mxu0 0.0
      %509 = vmatprep.subr.mxu0 0.0
      %510 = vmatpush1.msra.mxu0 0.0
      %511 = vmatprep.subr.mxu0 0.0
      %512 = vmatpush1.msra.mxu0 0.0
      %513 = vmatprep.subr.mxu0 0.0
      %514 = vmatpush1.msra.mxu0 %v485
      %515 = vmatprep.subr.mxu0 0.0
      %516 = vmatpush1.msra.mxu0 %v484
      %517 = vmatprep.subr.mxu0 0.0
      %518 = vmatpush1.msra.mxu0 %v483
      %519 = vmatprep.subr.mxu0 0.0
      %520 = vmatpush1.msra.mxu0 %v482
      %521 = vmatprep.subr.mxu0 0.0
      %522 = vmatpush1.msra.mxu0 %v481
      %523 = vmatprep.subr.mxu0 0.0
      %524 = vmatpush1.msra.mxu0 %v480
      %525 = vmatprep.subr.mxu0 0.0
      %526 = vmatpush1.msra.mxu0 %v479
      %527 = vmatprep.subr.mxu0 0.0
      %528 = vmatpush1.msra.mxu0 %v478
      %529 = vmatprep.subr.mxu0 0.0
      %530 = vmatpush2.msra.mxu0 0.0
      %531 = vmatprep.subr.mxu0 0.0
      %532 = vmatpush2.msra.mxu0 0.0
      %533 = vmatprep.subr.mxu0 0.0
      %534 = vmatpush2.msra.mxu0 0.0
      %535 = vmatprep.subr.mxu0 0.0
      %536 = vmatpush2.msra.mxu0 0.0
      %537 = vmatprep.subr.mxu0 0.0
      %538 = vmatpush2.msra.mxu0 0.0
      %539 = vmatprep.subr.mxu0 0.0
      %540 = vmatpush2.msra.mxu0 0.0
      %541 = vmatprep.subr.mxu0 0.0
      %542 = vmatpush2.msra.mxu0 0.0
      %543 = vmatprep.subr.mxu0 0.0
      %544 = vmatpush2.msra.mxu0 0.0
      %545 = vmatprep.subr.mxu0 0.0
      %546 = vmatpush2.msra.mxu0 0.0
      %547 = vmatprep.subr.mxu0 0.0
      %548 = vmatpush2.msra.mxu0 0.0
      %549 = vmatprep.subr.mxu0 0.0
      %550 = vmatpush2.msra.mxu0 0.0
      %551 = vmatprep.subr.mxu0 0.0
      %552 = vmatpush2.msra.mxu0 0.0
      %553 = vmatprep.subr.mxu0 0.0
      %554 = vmatpush2.msra.mxu0 0.0
      %555 = vmatprep.subr.mxu0 0.0
      %556 = vmatpush2.msra.mxu0 0.0
      %557 = vmatprep.subr.mxu0 0.0
      %558 = vmatpush2.msra.mxu0 0.0
      %559 = vmatprep.subr.mxu0 0.0
      %560 = vmatpush2.msra.mxu0 0.0
      %561 = vmatprep.mubr.f32.mxu0 0.0
      %562 = vmatmul.mubr.f32.gmra.mxu0 %v493
      %v563 = vpop.f32.mrf.mxu0
      %v564 = vadd.f32 0.0, %v563
      %v565 = vpop.f32.mrf.mxu0
      %566 = vmatprep.mubr.f32.mxu0 0.0
      %567 = vmatmul.mubr.f32.gmra.mxu0 %v495
      %v568 = vpop.f32.mrf.mxu0
      %v569 = vadd.f32 0.0, %v568
      %v570 = vpop.f32.mrf.mxu0
      %571 = vdwg.mxu0
      %v572 = vadd.f32 %v475, %v564
      %v573 = vadd.f32 %v476, %v569
      %s574 = scalar_lea.vmem %s1, 256
      %v575 = vld [vmem:[%s574] sm:$0xff]
      %v576 = vld [vmem:[%s574 + $0x8] sm:$0xff]
      %v577 = vld [vmem:[%s574 + $0x10] sm:$0xff]
      %v578 = vld [vmem:[%s574 + $0x18] sm:$0xff]
      %v579 = vld [vmem:[%s574 + $0x20] sm:$0xff]
      %v580 = vld [vmem:[%s574 + $0x28] sm:$0xff]
      %v581 = vld [vmem:[%s574 + $0x30] sm:$0xff]
      %v582 = vld [vmem:[%s574 + $0x38] sm:$0xff]
      %583 = vrot.lane.b32.xlu0 %v490, 124
      %v584 = vpop.permute.xlu0 %583
      %585 = vrot.lane.b32.xlu0 %v492, 124
      %v586 = vpop.permute.xlu0 %585
      %v587 = vsel %vm224, %v584, 0
      %v589 = vsel %vm224, %v586, 0
      %591 = vmatprep.subr.mxu0 0.0
      %592 = vmatpush1.msra.mxu0 0.0
      %593 = vmatprep.subr.mxu0 0.0
      %594 = vmatpush1.msra.mxu0 0.0
      %595 = vmatprep.subr.mxu0 0.0
      %596 = vmatpush1.msra.mxu0 0.0
      %597 = vmatprep.subr.mxu0 0.0
      %598 = vmatpush1.msra.mxu0 0.0
      %599 = vmatprep.subr.mxu0 0.0
      %600 = vmatpush1.msra.mxu0 0.0
      %601 = vmatprep.subr.mxu0 0.0
      %602 = vmatpush1.msra.mxu0 0.0
      %603 = vmatprep.subr.mxu0 0.0
      %604 = vmatpush1.msra.mxu0 0.0
      %605 = vmatprep.subr.mxu0 0.0
      %606 = vmatpush1.msra.mxu0 0.0
      %607 = vmatprep.subr.mxu0 0.0
      %608 = vmatpush1.msra.mxu0 %v582
      %609 = vmatprep.subr.mxu0 0.0
      %610 = vmatpush1.msra.mxu0 %v581
      %611 = vmatprep.subr.mxu0 0.0
      %612 = vmatpush1.msra.mxu0 %v580
      %613 = vmatprep.subr.mxu0 0.0
      %614 = vmatpush1.msra.mxu0 %v579
      %615 = vmatprep.subr.mxu0 0.0
      %616 = vmatpush1.msra.mxu0 %v578
      %617 = vmatprep.subr.mxu0 0.0
      %618 = vmatpush1.msra.mxu0 %v577
      %619 = vmatprep.subr.mxu0 0.0
      %620 = vmatpush1.msra.mxu0 %v576
      %621 = vmatprep.subr.mxu0 0.0
      %622 = vmatpush1.msra.mxu0 %v575
      %623 = vmatprep.subr.mxu0 0.0
      %624 = vmatpush2.msra.mxu0 0.0
      %625 = vmatprep.subr.mxu0 0.0
      %626 = vmatpush2.msra.mxu0 0.0
      %627 = vmatprep.subr.mxu0 0.0
      %628 = vmatpush2.msra.mxu0 0.0
      %629 = vmatprep.subr.mxu0 0.0
      %630 = vmatpush2.msra.mxu0 0.0
      %631 = vmatprep.subr.mxu0 0.0
      %632 = vmatpush2.msra.mxu0 0.0
      %633 = vmatprep.subr.mxu0 0.0
      %634 = vmatpush2.msra.mxu0 0.0
      %635 = vmatprep.subr.mxu0 0.0
      %636 = vmatpush2.msra.mxu0 0.0
      %637 = vmatprep.subr.mxu0 0.0
      %638 = vmatpush2.msra.mxu0 0.0
      %639 = vmatprep.subr.mxu0 0.0
      %640 = vmatpush2.msra.mxu0 0.0
      %641 = vmatprep.subr.mxu0 0.0
      %642 = vmatpush2.msra.mxu0 0.0
      %643 = vmatprep.subr.mxu0 0.0
      %644 = vmatpush2.msra.mxu0 0.0
      %645 = vmatprep.subr.mxu0 0.0
      %646 = vmatpush2.msra.mxu0 0.0
      %647 = vmatprep.subr.mxu0 0.0
      %648 = vmatpush2.msra.mxu0 0.0
      %649 = vmatprep.subr.mxu0 0.0
      %650 = vmatpush2.msra.mxu0 0.0
      %651 = vmatprep.subr.mxu0 0.0
      %652 = vmatpush2.msra.mxu0 0.0
      %653 = vmatprep.subr.mxu0 0.0
      %654 = vmatpush2.msra.mxu0 0.0
      %655 = vmatprep.mubr.f32.mxu0 0.0
      %656 = vmatmul.mubr.f32.gmra.mxu0 %v587
      %v657 = vpop.f32.mrf.mxu0
      %v658 = vadd.f32 0.0, %v657
      %v659 = vpop.f32.mrf.mxu0
      %660 = vmatprep.mubr.f32.mxu0 0.0
      %661 = vmatmul.mubr.f32.gmra.mxu0 %v589
      %v662 = vpop.f32.mrf.mxu0
      %v663 = vadd.f32 0.0, %v662
      %v664 = vpop.f32.mrf.mxu0
      %665 = vdwg.mxu0
      %v666 = vadd.f32 %v572, %v658
      %v667 = vadd.f32 %v573, %v663
      %s668 = scalar_lea.vmem %s1, 320
      %v669 = vld [vmem:[%s668] sm:$0xff]
      %v670 = vld [vmem:[%s668 + $0x8] sm:$0xff]
      %v671 = vld [vmem:[%s668 + $0x10] sm:$0xff]
      %v672 = vld [vmem:[%s668 + $0x18] sm:$0xff]
      %v673 = vld [vmem:[%s668 + $0x20] sm:$0xff]
      %v674 = vld [vmem:[%s668 + $0x28] sm:$0xff]
      %v675 = vld [vmem:[%s668 + $0x30] sm:$0xff]
      %v676 = vld [vmem:[%s668 + $0x38] sm:$0xff]
      %677 = vrot.lane.b32.xlu0 %v490, 120
      %v678 = vpop.permute.xlu0 %677
      %679 = vrot.lane.b32.xlu0 %v492, 120
      %v680 = vpop.permute.xlu0 %679
      %v681 = vsel %vm224, %v678, 0
      %v683 = vsel %vm224, %v680, 0
      %685 = vmatprep.subr.mxu0 0.0
      %686 = vmatpush1.msra.mxu0 0.0
      %687 = vmatprep.subr.mxu0 0.0
      %688 = vmatpush1.msra.mxu0 0.0
      %689 = vmatprep.subr.mxu0 0.0
      %690 = vmatpush1.msra.mxu0 0.0
      %691 = vmatprep.subr.mxu0 0.0
      %692 = vmatpush1.msra.mxu0 0.0
      %693 = vmatprep.subr.mxu0 0.0
      %694 = vmatpush1.msra.mxu0 0.0
      %695 = vmatprep.subr.mxu0 0.0
      %696 = vmatpush1.msra.mxu0 0.0
      %697 = vmatprep.subr.mxu0 0.0
      %698 = vmatpush1.msra.mxu0 0.0
      %699 = vmatprep.subr.mxu0 0.0
      %700 = vmatpush1.msra.mxu0 0.0
      %701 = vmatprep.subr.mxu0 0.0
      %702 = vmatpush1.msra.mxu0 %v676
      %703 = vmatprep.subr.mxu0 0.0
      %704 = vmatpush1.msra.mxu0 %v675
      %705 = vmatprep.subr.mxu0 0.0
      %706 = vmatpush1.msra.mxu0 %v674
      %707 = vmatprep.subr.mxu0 0.0
      %708 = vmatpush1.msra.mxu0 %v673
      %709 = vmatprep.subr.mxu0 0.0
      %710 = vmatpush1.msra.mxu0 %v672
      %711 = vmatprep.subr.mxu0 0.0
      %712 = vmatpush1.msra.mxu0 %v671
      %713 = vmatprep.subr.mxu0 0.0
      %714 = vmatpush1.msra.mxu0 %v670
      %715 = vmatprep.subr.mxu0 0.0
      %716 = vmatpush1.msra.mxu0 %v669
      %717 = vmatprep.subr.mxu0 0.0
      %718 = vmatpush2.msra.mxu0 0.0
      %719 = vmatprep.subr.mxu0 0.0
      %720 = vmatpush2.msra.mxu0 0.0
      %721 = vmatprep.subr.mxu0 0.0
      %722 = vmatpush2.msra.mxu0 0.0
      %723 = vmatprep.subr.mxu0 0.0
      %724 = vmatpush2.msra.mxu0 0.0
      %725 = vmatprep.subr.mxu0 0.0
      %726 = vmatpush2.msra.mxu0 0.0
      %727 = vmatprep.subr.mxu0 0.0
      %728 = vmatpush2.msra.mxu0 0.0
      %729 = vmatprep.subr.mxu0 0.0
      %730 = vmatpush2.msra.mxu0 0.0
      %731 = vmatprep.subr.mxu0 0.0
      %732 = vmatpush2.msra.mxu0 0.0
      %733 = vmatprep.subr.mxu0 0.0
      %734 = vmatpush2.msra.mxu0 0.0
      %735 = vmatprep.subr.mxu0 0.0
      %736 = vmatpush2.msra.mxu0 0.0
      %737 = vmatprep.subr.mxu0 0.0
      %738 = vmatpush2.msra.mxu0 0.0
      %739 = vmatprep.subr.mxu0 0.0
      %740 = vmatpush2.msra.mxu0 0.0
      %741 = vmatprep.subr.mxu0 0.0
      %742 = vmatpush2.msra.mxu0 0.0
      %743 = vmatprep.subr.mxu0 0.0
      %744 = vmatpush2.msra.mxu0 0.0
      %745 = vmatprep.subr.mxu0 0.0
      %746 = vmatpush2.msra.mxu0 0.0
      %747 = vmatprep.subr.mxu0 0.0
      %748 = vmatpush2.msra.mxu0 0.0
      %749 = vmatprep.mubr.f32.mxu0 0.0
      %750 = vmatmul.mubr.f32.gmra.mxu0 %v681
      %v751 = vpop.f32.mrf.mxu0
      %v752 = vadd.f32 0.0, %v751
      %v753 = vpop.f32.mrf.mxu0
      %754 = vmatprep.mubr.f32.mxu0 0.0
      %755 = vmatmul.mubr.f32.gmra.mxu0 %v683
      %v756 = vpop.f32.mrf.mxu0
      %v757 = vadd.f32 0.0, %v756
      %v758 = vpop.f32.mrf.mxu0
      %759 = vdwg.mxu0
      %v760 = vadd.f32 %v666, %v752
      %v761 = vadd.f32 %v667, %v757
      %s762 = scalar_lea.vmem %s1, 384
      %v763 = vld [vmem:[%s762] sm:$0xff]
      %v764 = vld [vmem:[%s762 + $0x8] sm:$0xff]
      %v765 = vld [vmem:[%s762 + $0x10] sm:$0xff]
      %v766 = vld [vmem:[%s762 + $0x18] sm:$0xff]
      %v767 = vld [vmem:[%s762 + $0x20] sm:$0xff]
      %v768 = vld [vmem:[%s762 + $0x28] sm:$0xff]
      %v769 = vld [vmem:[%s762 + $0x30] sm:$0xff]
      %v770 = vld [vmem:[%s762 + $0x38] sm:$0xff]
      %vm771 = vcmask 1045504
      %v772 = vrot.slane %v198, 2
      %v773 = vrot.slane %v199, 2
      %v774 = vsel %vm771, %v772, %v773
      %v775 = vrot.slane %v200, 2
      %v776 = vsel %vm771, %v773, %v775
      %v777 = vsel %vm224, %v774, 0
      %v779 = vsel %vm224, %v776, 0
      %781 = vmatprep.subr.mxu0 0.0
      %782 = vmatpush1.msra.mxu0 0.0
      %783 = vmatprep.subr.mxu0 0.0
      %784 = vmatpush1.msra.mxu0 0.0
      %785 = vmatprep.subr.mxu0 0.0
      %786 = vmatpush1.msra.mxu0 0.0
      %787 = vmatprep.subr.mxu0 0.0
      %788 = vmatpush1.msra.mxu0 0.0
      %789 = vmatprep.subr.mxu0 0.0
      %790 = vmatpush1.msra.mxu0 0.0
      %791 = vmatprep.subr.mxu0 0.0
      %792 = vmatpush1.msra.mxu0 0.0
      %793 = vmatprep.subr.mxu0 0.0
      %794 = vmatpush1.msra.mxu0 0.0
      %795 = vmatprep.subr.mxu0 0.0
      %796 = vmatpush1.msra.mxu0 0.0
      %797 = vmatprep.subr.mxu0 0.0
      %798 = vmatpush1.msra.mxu0 %v770
      %799 = vmatprep.subr.mxu0 0.0
      %800 = vmatpush1.msra.mxu0 %v769
      %801 = vmatprep.subr.mxu0 0.0
      %802 = vmatpush1.msra.mxu0 %v768
      %803 = vmatprep.subr.mxu0 0.0
      %804 = vmatpush1.msra.mxu0 %v767
      %805 = vmatprep.subr.mxu0 0.0
      %806 = vmatpush1.msra.mxu0 %v766
      %807 = vmatprep.subr.mxu0 0.0
      %808 = vmatpush1.msra.mxu0 %v765
      %809 = vmatprep.subr.mxu0 0.0
      %810 = vmatpush1.msra.mxu0 %v764
      %811 = vmatprep.subr.mxu0 0.0
      %812 = vmatpush1.msra.mxu0 %v763
      %813 = vmatprep.subr.mxu0 0.0
      %814 = vmatpush2.msra.mxu0 0.0
      %815 = vmatprep.subr.mxu0 0.0
      %816 = vmatpush2.msra.mxu0 0.0
      %817 = vmatprep.subr.mxu0 0.0
      %818 = vmatpush2.msra.mxu0 0.0
      %819 = vmatprep.subr.mxu0 0.0
      %820 = vmatpush2.msra.mxu0 0.0
      %821 = vmatprep.subr.mxu0 0.0
      %822 = vmatpush2.msra.mxu0 0.0
      %823 = vmatprep.subr.mxu0 0.0
      %824 = vmatpush2.msra.mxu0 0.0
      %825 = vmatprep.subr.mxu0 0.0
      %826 = vmatpush2.msra.mxu0 0.0
      %827 = vmatprep.subr.mxu0 0.0
      %828 = vmatpush2.msra.mxu0 0.0
      %829 = vmatprep.subr.mxu0 0.0
      %830 = vmatpush2.msra.mxu0 0.0
      %831 = vmatprep.subr.mxu0 0.0
      %832 = vmatpush2.msra.mxu0 0.0
      %833 = vmatprep.subr.mxu0 0.0
      %834 = vmatpush2.msra.mxu0 0.0
      %835 = vmatprep.subr.mxu0 0.0
      %836 = vmatpush2.msra.mxu0 0.0
      %837 = vmatprep.subr.mxu0 0.0
      %838 = vmatpush2.msra.mxu0 0.0
      %839 = vmatprep.subr.mxu0 0.0
      %840 = vmatpush2.msra.mxu0 0.0
      %841 = vmatprep.subr.mxu0 0.0
      %842 = vmatpush2.msra.mxu0 0.0
      %843 = vmatprep.subr.mxu0 0.0
      %844 = vmatpush2.msra.mxu0 0.0
      %845 = vmatprep.mubr.f32.mxu0 0.0
      %846 = vmatmul.mubr.f32.gmra.mxu0 %v777
      %v847 = vpop.f32.mrf.mxu0
      %v848 = vadd.f32 0.0, %v847
      %v849 = vpop.f32.mrf.mxu0
      %850 = vmatprep.mubr.f32.mxu0 0.0
      %851 = vmatmul.mubr.f32.gmra.mxu0 %v779
      %v852 = vpop.f32.mrf.mxu0
      %v853 = vadd.f32 0.0, %v852
      %v854 = vpop.f32.mrf.mxu0
      %855 = vdwg.mxu0
      %v856 = vadd.f32 %v760, %v848
      %v857 = vadd.f32 %v761, %v853
      %s858 = scalar_lea.vmem %s1, 448
      %v859 = vld [vmem:[%s858] sm:$0xff]
      %v860 = vld [vmem:[%s858 + $0x8] sm:$0xff]
      %v861 = vld [vmem:[%s858 + $0x10] sm:$0xff]
      %v862 = vld [vmem:[%s858 + $0x18] sm:$0xff]
      %v863 = vld [vmem:[%s858 + $0x20] sm:$0xff]
      %v864 = vld [vmem:[%s858 + $0x28] sm:$0xff]
      %v865 = vld [vmem:[%s858 + $0x30] sm:$0xff]
      %v866 = vld [vmem:[%s858 + $0x38] sm:$0xff]
      %867 = vrot.lane.b32.xlu0 %v774, 124
      %v868 = vpop.permute.xlu0 %867
      %869 = vrot.lane.b32.xlu0 %v776, 124
      %v870 = vpop.permute.xlu0 %869
      %v871 = vsel %vm224, %v868, 0
      %v873 = vsel %vm224, %v870, 0
      %875 = vmatprep.subr.mxu0 0.0
      %876 = vmatpush1.msra.mxu0 0.0
      %877 = vmatprep.subr.mxu0 0.0
      %878 = vmatpush1.msra.mxu0 0.0
      %879 = vmatprep.subr.mxu0 0.0
      %880 = vmatpush1.msra.mxu0 0.0
      %881 = vmatprep.subr.mxu0 0.0
      %882 = vmatpush1.msra.mxu0 0.0
      %883 = vmatprep.subr.mxu0 0.0
      %884 = vmatpush1.msra.mxu0 0.0
      %885 = vmatprep.subr.mxu0 0.0
      %886 = vmatpush1.msra.mxu0 0.0
      %887 = vmatprep.subr.mxu0 0.0
      %888 = vmatpush1.msra.mxu0 0.0
      %889 = vmatprep.subr.mxu0 0.0
      %890 = vmatpush1.msra.mxu0 0.0
      %891 = vmatprep.subr.mxu0 0.0
      %892 = vmatpush1.msra.mxu0 %v866
      %893 = vmatprep.subr.mxu0 0.0
      %894 = vmatpush1.msra.mxu0 %v865
      %895 = vmatprep.subr.mxu0 0.0
      %896 = vmatpush1.msra.mxu0 %v864
      %897 = vmatprep.subr.mxu0 0.0
      %898 = vmatpush1.msra.mxu0 %v863
      %899 = vmatprep.subr.mxu0 0.0
      %900 = vmatpush1.msra.mxu0 %v862
      %901 = vmatprep.subr.mxu0 0.0
      %902 = vmatpush1.msra.mxu0 %v861
      %903 = vmatprep.subr.mxu0 0.0
      %904 = vmatpush1.msra.mxu0 %v860
      %905 = vmatprep.subr.mxu0 0.0
      %906 = vmatpush1.msra.mxu0 %v859
      %907 = vmatprep.subr.mxu0 0.0
      %908 = vmatpush2.msra.mxu0 0.0
      %909 = vmatprep.subr.mxu0 0.0
      %910 = vmatpush2.msra.mxu0 0.0
      %911 = vmatprep.subr.mxu0 0.0
      %912 = vmatpush2.msra.mxu0 0.0
      %913 = vmatprep.subr.mxu0 0.0
      %914 = vmatpush2.msra.mxu0 0.0
      %915 = vmatprep.subr.mxu0 0.0
      %916 = vmatpush2.msra.mxu0 0.0
      %917 = vmatprep.subr.mxu0 0.0
      %918 = vmatpush2.msra.mxu0 0.0
      %919 = vmatprep.subr.mxu0 0.0
      %920 = vmatpush2.msra.mxu0 0.0
      %921 = vmatprep.subr.mxu0 0.0
      %922 = vmatpush2.msra.mxu0 0.0
      %923 = vmatprep.subr.mxu0 0.0
      %924 = vmatpush2.msra.mxu0 0.0
      %925 = vmatprep.subr.mxu0 0.0
      %926 = vmatpush2.msra.mxu0 0.0
      %927 = vmatprep.subr.mxu0 0.0
      %928 = vmatpush2.msra.mxu0 0.0
      %929 = vmatprep.subr.mxu0 0.0
      %930 = vmatpush2.msra.mxu0 0.0
      %931 = vmatprep.subr.mxu0 0.0
      %932 = vmatpush2.msra.mxu0 0.0
      %933 = vmatprep.subr.mxu0 0.0
      %934 = vmatpush2.msra.mxu0 0.0
      %935 = vmatprep.subr.mxu0 0.0
      %936 = vmatpush2.msra.mxu0 0.0
      %937 = vmatprep.subr.mxu0 0.0
      %938 = vmatpush2.msra.mxu0 0.0
      %939 = vmatprep.mubr.f32.mxu0 0.0
      %940 = vmatmul.mubr.f32.gmra.mxu0 %v871
      %v941 = vpop.f32.mrf.mxu0
      %v942 = vadd.f32 0.0, %v941
      %v943 = vpop.f32.mrf.mxu0
      %944 = vmatprep.mubr.f32.mxu0 0.0
      %945 = vmatmul.mubr.f32.gmra.mxu0 %v873
      %v946 = vpop.f32.mrf.mxu0
      %v947 = vadd.f32 0.0, %v946
      %v948 = vpop.f32.mrf.mxu0
      %949 = vdwg.mxu0
      %v950 = vadd.f32 %v856, %v942
      %v951 = vadd.f32 %v857, %v947
      %s952 = scalar_lea.vmem %s1, 512
      %v953 = vld [vmem:[%s952] sm:$0xff]
      %v954 = vld [vmem:[%s952 + $0x8] sm:$0xff]
      %v955 = vld [vmem:[%s952 + $0x10] sm:$0xff]
      %v956 = vld [vmem:[%s952 + $0x18] sm:$0xff]
      %v957 = vld [vmem:[%s952 + $0x20] sm:$0xff]
      %v958 = vld [vmem:[%s952 + $0x28] sm:$0xff]
      %v959 = vld [vmem:[%s952 + $0x30] sm:$0xff]
      %v960 = vld [vmem:[%s952 + $0x38] sm:$0xff]
      %961 = vrot.lane.b32.xlu0 %v774, 120
      %v962 = vpop.permute.xlu0 %961
      %963 = vrot.lane.b32.xlu0 %v776, 120
      %v964 = vpop.permute.xlu0 %963
      %v965 = vsel %vm224, %v962, 0
      %v967 = vsel %vm224, %v964, 0
      %969 = vmatprep.subr.mxu0 0.0
      %970 = vmatpush1.msra.mxu0 0.0
      %971 = vmatprep.subr.mxu0 0.0
      %972 = vmatpush1.msra.mxu0 0.0
      %973 = vmatprep.subr.mxu0 0.0
      %974 = vmatpush1.msra.mxu0 0.0
      %975 = vmatprep.subr.mxu0 0.0
      %976 = vmatpush1.msra.mxu0 0.0
      %977 = vmatprep.subr.mxu0 0.0
      %978 = vmatpush1.msra.mxu0 0.0
      %979 = vmatprep.subr.mxu0 0.0
      %980 = vmatpush1.msra.mxu0 0.0
      %981 = vmatprep.subr.mxu0 0.0
      %982 = vmatpush1.msra.mxu0 0.0
      %983 = vmatprep.subr.mxu0 0.0
      %984 = vmatpush1.msra.mxu0 0.0
      %985 = vmatprep.subr.mxu0 0.0
      %986 = vmatpush1.msra.mxu0 %v960
      %987 = vmatprep.subr.mxu0 0.0
      %988 = vmatpush1.msra.mxu0 %v959
      %989 = vmatprep.subr.mxu0 0.0
      %990 = vmatpush1.msra.mxu0 %v958
      %991 = vmatprep.subr.mxu0 0.0
      %992 = vmatpush1.msra.mxu0 %v957
      %993 = vmatprep.subr.mxu0 0.0
      %994 = vmatpush1.msra.mxu0 %v956
      %995 = vmatprep.subr.mxu0 0.0
      %996 = vmatpush1.msra.mxu0 %v955
      %997 = vmatprep.subr.mxu0 0.0
      %998 = vmatpush1.msra.mxu0 %v954
      %999 = vmatprep.subr.mxu0 0.0
      %1000 = vmatpush1.msra.mxu0 %v953
      %1001 = vmatprep.subr.mxu0 0.0
      %1002 = vmatpush2.msra.mxu0 0.0
      %1003 = vmatprep.subr.mxu0 0.0
      %1004 = vmatpush2.msra.mxu0 0.0
      %1005 = vmatprep.subr.mxu0 0.0
      %1006 = vmatpush2.msra.mxu0 0.0
      %1007 = vmatprep.subr.mxu0 0.0
      %1008 = vmatpush2.msra.mxu0 0.0
      %1009 = vmatprep.subr.mxu0 0.0
      %1010 = vmatpush2.msra.mxu0 0.0
      %1011 = vmatprep.subr.mxu0 0.0
      %1012 = vmatpush2.msra.mxu0 0.0
      %1013 = vmatprep.subr.mxu0 0.0
      %1014 = vmatpush2.msra.mxu0 0.0
      %1015 = vmatprep.subr.mxu0 0.0
      %1016 = vmatpush2.msra.mxu0 0.0
      %1017 = vmatprep.subr.mxu0 0.0
      %1018 = vmatpush2.msra.mxu0 0.0
      %1019 = vmatprep.subr.mxu0 0.0
      %1020 = vmatpush2.msra.mxu0 0.0
      %1021 = vmatprep.subr.mxu0 0.0
      %1022 = vmatpush2.msra.mxu0 0.0
      %1023 = vmatprep.subr.mxu0 0.0
      %1024 = vmatpush2.msra.mxu0 0.0
      %1025 = vmatprep.subr.mxu0 0.0
      %1026 = vmatpush2.msra.mxu0 0.0
      %1027 = vmatprep.subr.mxu0 0.0
      %1028 = vmatpush2.msra.mxu0 0.0
      %1029 = vmatprep.subr.mxu0 0.0
      %1030 = vmatpush2.msra.mxu0 0.0
      %1031 = vmatprep.subr.mxu0 0.0
      %1032 = vmatpush2.msra.mxu0 0.0
      %1033 = vmatprep.mubr.f32.mxu0 0.0
      %1034 = vmatmul.mubr.f32.gmra.mxu0 %v965
      %v1035 = vpop.f32.mrf.mxu0
      %v1036 = vadd.f32 0.0, %v1035
      %v1037 = vpop.f32.mrf.mxu0
      %1038 = vmatprep.mubr.f32.mxu0 0.0
      %1039 = vmatmul.mubr.f32.gmra.mxu0 %v967
      %v1040 = vpop.f32.mrf.mxu0
      %v1041 = vadd.f32 0.0, %v1040
      %v1042 = vpop.f32.mrf.mxu0
      %1043 = vdwg.mxu0
      %v1044 = vadd.f32 %v950, %v1036
      %v1045 = vadd.f32 %v951, %v1041
      %v1046 = vld [vmem:[%s2] sm:$0x1]
      %v1048 = vlaneseq
      %v1049 = vshrl.u32 %v1048, 7
      %v1050 = vsub.s32 0, %v1049
      %v1051 = vrot.slane %v1046, %v1050
      %v1053 = vmul.f32 %v1044, %v1051
      %v1054 = vmul.f32 %v1045, %v1051
      %v1055 = vld [vmem:[%s3] sm:$0x1]
      %v1057 = vlaneseq
      %v1058 = vshrl.u32 %v1057, 7
      %v1059 = vsub.s32 0, %v1058
      %v1060 = vrot.slane %v1055, %v1059
      %v1062 = vadd.f32 %v1053, %v1060
      %v1063 = vadd.f32 %v1054, %v1060
      %v1064 = vmax.f32 %v1062, 0.0
      %v1065 = vmax.f32 %v1063, 0.0
      %1066 = vst [vmem:[%s197] sm:$0xff] %v1064
      %1067 = vst [vmem:[%s197 + $0x8] sm:$0xff] %v1065
      %p1068 = scmp.lt.s32.totalorder %s15, 1
      %s1069 = scalar_select %p1068, %s15, 1
      %s1070 = smul.addr %s1069, 2
      %s1071 = smul.addr %s1070, 8
      %s1072 = scalar_lea.vmem %s4, %s1071
      // Predicated region
      $region37: #{fused_conv_bn_relu.1} parent=35 // pred_check
        %p1073 = pneg %p122
      $region38: #{fused_conv_bn_relu.1} parent=35 // pred_check_branch
        %1075 = sbr.rel (%p1073) target = $region40
      $region39: #{fused_conv_bn_relu.1} parent=35 // pred_region
        _
      $region40: #{fused_conv_bn_relu.1} parent=35 // pred_fallthru
        _
    $region36: #{fused_conv_bn_relu.1} parent=5 // pred_fallthru
      _
    %p1076 = scmp.le.s32.totalorder 2, %s10
    // Predicated region
    $region41: #{fused_conv_bn_relu.1} parent=5 // pred_check
      %p1077 = pneg %p1076
    $region42: #{fused_conv_bn_relu.1} parent=5 // pred_check_branch
      %1079 = sbr.rel (%p1077) target = $region44
    $region43: #{fused_conv_bn_relu.1} parent=5 // pred_region
      %s1080 = ssub.s32 %s10, 2
      // Predicated region
      $region45: #{fused_conv_bn_relu.1} parent=43 // pred_check
        %p1081 = pneg %p128
      $region46: #{fused_conv_bn_relu.1} parent=43 // pred_check_branch
        %1083 = sbr.rel (%p1081) target = $region48
      $region47: #{fused_conv_bn_relu.1} parent=43 // pred_region
        %p1084 = scmp.lt.s32.totalorder %s16, 1
        %s1085 = scalar_select %p1084, %s16, 1
        %s1086 = smul.addr %s1085, 2
        %s1087 = smul.addr %s1086, 8
        %s1088 = scalar_lea.vmem %s4, %s1087
      $region48: #{fused_conv_bn_relu.1} parent=43 // pred_fallthru
        _
    $region44: #{fused_conv_bn_relu.1} parent=5 // pred_fallthru
      _
  $region6: #{fused_conv_bn_relu.1} parent=0 // loop_footer
    %s14 = sadd.s32 1, %s10
  $region7: #{fused_conv_bn_relu.1} parent=0 // loop_footer_branch
    %9 = sbr.rel target = $region3
  $region8: #{fused_conv_bn_relu.1} parent=0 // loop_exit
    _

</llo_original>
